<compile_context>
chip_gen: v7x
topology: tpu7x:2x2x1
jax: 0.10.0
libtpu: 0.0.40
codegen_flags: <defaults>
</compile_context>

<pallas_src>
import jax
import jax.numpy as jnp
from jax.experimental import pallas as pl
from jax.experimental.pallas import tpu as pltpu


def _mlp_kernel(x_ref, *refs):
    """refs = (w1, b1, w2, b2, ..., wN, bN, o_ref)."""
    o_ref = refs[-1]
    wb = refs[:-1]
    n_layers = len(wb) // 2

    h = x_ref[...].astype(jnp.float32)
    for i in range(n_layers):
        w = wb[2 * i][...].astype(jnp.float32)
        b = wb[2 * i + 1][...].astype(jnp.float32)
        h = jnp.dot(h, w, preferred_element_type=jnp.float32) + b
        if i < n_layers - 1:        # hidden layers: ReLU
            h = jnp.maximum(h, 0.0)
        # last layer: out_activation = Identity
    o_ref[...] = h.astype(o_ref.dtype)


def mlp_forward(x, weights, biases, *, block_b=128):
    """Fused MLP forward.

    x:        (B, in_dim) float32
    weights:  list of (d_in_i, d_out_i) matrices (x @ W + b convention,
              i.e. torch's Linear.weight transposed)
    biases:   list of (d_out_i,) vectors
    """
    B, in_dim = x.shape
    out_dim = weights[-1].shape[1]

    block_b = min(block_b, B)
    assert B % block_b == 0, "demo wrapper expects B divisible by block_b"
    grid = (B // block_b,)

    in_specs = [pl.BlockSpec((block_b, in_dim), lambda i: (i, 0))]
    args = [x]
    for w, b in zip(weights, biases):
        d_in, d_out = w.shape
        in_specs.append(pl.BlockSpec((d_in, d_out), lambda i: (0, 0)))
        in_specs.append(pl.BlockSpec((1, d_out), lambda i: (0, 0)))
        args.append(w)
        args.append(b.reshape(1, d_out))

    flops = 2 * B * sum(w.shape[0] * w.shape[1] for w in weights)
    bytes_accessed = 4 * (
        x.size
        + B * out_dim
        + sum(w.size for w in weights)
        + sum(b.size for b in biases)
    )

    return pl.pallas_call(
        _mlp_kernel,
        out_shape=jax.ShapeDtypeStruct((B, out_dim), x.dtype),
        grid=grid,
        in_specs=in_specs,
        out_specs=pl.BlockSpec((block_b, out_dim), lambda i: (i, 0)),
        compiler_params=pltpu.CompilerParams(
            dimension_semantics=("parallel",),
        ),
        cost_estimate=pl.CostEstimate(
            flops=flops, transcendentals=0, bytes_accessed=bytes_accessed
        ),
    )(*args)


def mlp_forward_ref(x, weights, biases):
    h = x.astype(jnp.float32)
    n = len(weights)
    for i, (w, b) in enumerate(zip(weights, biases)):
        h = h @ w.astype(jnp.float32) + b.astype(jnp.float32)
        if i < n - 1:
            h = jnp.maximum(h, 0.0)
    return h.astype(x.dtype)


if __name__ == "__main__":
    # Mlp(in_dim=32, hidden_dims=[64, 128], out_dim=128,
    #     activation=nn.ReLU(), out_activation=nn.Identity())
    in_dim, hidden_dims, out_dim = 32, [64, 128], 128
    batch = 512                     # tiled over the grid in blocks of 128 rows
    dims = [in_dim] + hidden_dims + [out_dim]

    key = jax.random.PRNGKey(0)
    keys = jax.random.split(key, len(dims))
    x = jax.random.normal(keys[0], (batch, in_dim), dtype=jnp.float32)

    # Deterministic xavier-uniform weights + zero biases (Mlp._init_weights).
    weights, biases = [], []
    for li in range(len(dims) - 1):
        d_in, d_out = dims[li], dims[li + 1]
        limit = (6.0 / (d_in + d_out)) ** 0.5
        w = jax.random.uniform(keys[1 + li], (d_in, d_out), jnp.float32, -limit, limit)
        weights.append(w)
        biases.append(jnp.zeros((d_out,), dtype=jnp.float32))

    out = mlp_forward(x, weights, biases, block_b=128)
    out = jax.block_until_ready(out)

    ref = mlp_forward_ref(x, weights, biases)
    assert out.shape == (batch, out_dim)
    assert jnp.allclose(out, ref, atol=1e-4, rtol=1e-4), "mismatch vs reference"

    print("KERNEL_OK")
</pallas_src>

<mosaic_0001>
module attributes {stable_mosaic.version = 11 : i64} {
  func.func @_mlp_kernel(%arg0: i32, %arg1: memref<128x32xf32, #tpu.memory_space<vmem>>, %arg2: memref<32x64xf32, #tpu.memory_space<vmem>>, %arg3: memref<1x64xf32, #tpu.memory_space<vmem>>, %arg4: memref<64x128xf32, #tpu.memory_space<vmem>>, %arg5: memref<1x128xf32, #tpu.memory_space<vmem>>, %arg6: memref<128x128xf32, #tpu.memory_space<vmem>>, %arg7: memref<1x128xf32, #tpu.memory_space<vmem>>, %arg8: memref<128x128xf32, #tpu.memory_space<vmem>>) attributes {dimension_semantics = [#tpu.dimension_semantics<parallel>], iteration_bounds = array<i64: 4>, scalar_prefetch = 0 : i64, scratch_operands = 0 : i64, tpu.core_type = #tpu.core_type<tc>, window_params = [{transform_indices = @transform_0, window_bounds = array<i64: 128, 32>}, {pipeline_mode = #tpu.pipeline_mode<synchronous>, transform_indices = @transform_1, window_bounds = array<i64: 32, 64>}, {pipeline_mode = #tpu.pipeline_mode<synchronous>, transform_indices = @transform_2, window_bounds = array<i64: 1, 64>}, {pipeline_mode = #tpu.pipeline_mode<synchronous>, transform_indices = @transform_3, window_bounds = array<i64: 64, 128>}, {pipeline_mode = #tpu.pipeline_mode<synchronous>, transform_indices = @transform_4, window_bounds = array<i64: 1, 128>}, {pipeline_mode = #tpu.pipeline_mode<synchronous>, transform_indices = @transform_5, window_bounds = array<i64: 128, 128>}, {pipeline_mode = #tpu.pipeline_mode<synchronous>, transform_indices = @transform_6, window_bounds = array<i64: 1, 128>}, {transform_indices = @transform_7, window_bounds = array<i64: 128, 128>}]} {
    %c0 = arith.constant 0 : index
    %c0_0 = arith.constant 0 : index
    %0 = vector.load %arg1[%c0, %c0_0] : memref<128x32xf32, #tpu.memory_space<vmem>>, vector<128x32xf32>
    %c0_1 = arith.constant 0 : index
    %c0_2 = arith.constant 0 : index
    %1 = vector.load %arg2[%c0_1, %c0_2] : memref<32x64xf32, #tpu.memory_space<vmem>>, vector<32x64xf32>
    %c0_3 = arith.constant 0 : index
    %c0_4 = arith.constant 0 : index
    %2 = vector.load %arg3[%c0_3, %c0_4] : memref<1x64xf32, #tpu.memory_space<vmem>>, vector<1x64xf32>
    %cst = arith.constant dense<0.000000e+00> : vector<128x64xf32>
    %3 = tpu.matmul %0, %1, %cst {dimension_numbers = #tpu.dot_dimension_numbers<[1], [0], [0], [1], [0, 0, 1, 1], [], []>} : vector<128x32xf32>, vector<32x64xf32>, vector<128x64xf32> -> vector<128x64xf32>
    %4 = vector.broadcast %2 : vector<1x64xf32> to vector<128x64xf32>
    %5 = arith.addf %3, %4 : vector<128x64xf32>
    %cst_5 = arith.constant 0.000000e+00 : f32
    %6 = vector.broadcast %cst_5 : f32 to vector<128x64xf32>
    %7 = arith.maximumf %5, %6 : vector<128x64xf32>
    %c0_6 = arith.constant 0 : index
    %c0_7 = arith.constant 0 : index
    %8 = vector.load %arg4[%c0_6, %c0_7] : memref<64x128xf32, #tpu.memory_space<vmem>>, vector<64x128xf32>
    %c0_8 = arith.constant 0 : index
    %c0_9 = arith.constant 0 : index
    %9 = vector.load %arg5[%c0_8, %c0_9] : memref<1x128xf32, #tpu.memory_space<vmem>>, vector<1x128xf32>
    %cst_10 = arith.constant dense<0.000000e+00> : vector<128x128xf32>
    %10 = tpu.matmul %7, %8, %cst_10 {dimension_numbers = #tpu.dot_dimension_numbers<[1], [0], [0], [1], [0, 0, 1, 1], [], []>} : vector<128x64xf32>, vector<64x128xf32>, vector<128x128xf32> -> vector<128x128xf32>
    %11 = vector.broadcast %9 : vector<1x128xf32> to vector<128x128xf32>
    %12 = arith.addf %10, %11 : vector<128x128xf32>
    %cst_11 = arith.constant 0.000000e+00 : f32
    %13 = vector.broadcast %cst_11 : f32 to vector<128x128xf32>
    %14 = arith.maximumf %12, %13 : vector<128x128xf32>
    %c0_12 = arith.constant 0 : index
    %c0_13 = arith.constant 0 : index
    %15 = vector.load %arg6[%c0_12, %c0_13] : memref<128x128xf32, #tpu.memory_space<vmem>>, vector<128x128xf32>
    %c0_14 = arith.constant 0 : index
    %c0_15 = arith.constant 0 : index
    %16 = vector.load %arg7[%c0_14, %c0_15] : memref<1x128xf32, #tpu.memory_space<vmem>>, vector<1x128xf32>
    %cst_16 = arith.constant dense<0.000000e+00> : vector<128x128xf32>
    %17 = tpu.matmul %14, %15, %cst_16 {dimension_numbers = #tpu.dot_dimension_numbers<[1], [0], [0], [1], [0, 0, 1, 1], [], []>} : vector<128x128xf32>, vector<128x128xf32>, vector<128x128xf32> -> vector<128x128xf32>
    %18 = vector.broadcast %16 : vector<1x128xf32> to vector<128x128xf32>
    %19 = arith.addf %17, %18 : vector<128x128xf32>
    %c0_17 = arith.constant 0 : index
    %c0_18 = arith.constant 0 : index
    %20 = vector.load %arg8[%c0_17, %c0_18] : memref<128x128xf32, #tpu.memory_space<vmem>>, vector<128x128xf32>
    tpu.vector_store %arg8[%c0_17, %c0_18], %19 {strides = array<i32>} : memref<128x128xf32, #tpu.memory_space<vmem>>, vector<128x128xf32>,
    return
  }
  func.func @transform_0(%arg0: i32) -> (i32, i32) {
    %c0_i32 = arith.constant 0 : i32
    %c0_i32_0 = arith.constant 0 : i32
    return %arg0, %c0_i32 : i32, i32
  }
  func.func @transform_1(%arg0: i32) -> (i32, i32) {
    %c0_i32 = arith.constant 0 : i32
    %c0_i32_0 = arith.constant 0 : i32
    %c0_i32_1 = arith.constant 0 : i32
    return %c0_i32, %c0_i32_0 : i32, i32
  }
  func.func @transform_2(%arg0: i32) -> (i32, i32) {
    %c0_i32 = arith.constant 0 : i32
    %c0_i32_0 = arith.constant 0 : i32
    %c0_i32_1 = arith.constant 0 : i32
    return %c0_i32, %c0_i32_0 : i32, i32
  }
  func.func @transform_3(%arg0: i32) -> (i32, i32) {
    %c0_i32 = arith.constant 0 : i32
    %c0_i32_0 = arith.constant 0 : i32
    %c0_i32_1 = arith.constant 0 : i32
    return %c0_i32, %c0_i32_0 : i32, i32
  }
  func.func @transform_4(%arg0: i32) -> (i32, i32) {
    %c0_i32 = arith.constant 0 : i32
    %c0_i32_0 = arith.constant 0 : i32
    %c0_i32_1 = arith.constant 0 : i32
    return %c0_i32, %c0_i32_0 : i32, i32
  }
  func.func @transform_5(%arg0: i32) -> (i32, i32) {
    %c0_i32 = arith.constant 0 : i32
    %c0_i32_0 = arith.constant 0 : i32
    %c0_i32_1 = arith.constant 0 : i32
    return %c0_i32, %c0_i32_0 : i32, i32
  }
  func.func @transform_6(%arg0: i32) -> (i32, i32) {
    %c0_i32 = arith.constant 0 : i32
    %c0_i32_0 = arith.constant 0 : i32
    %c0_i32_1 = arith.constant 0 : i32
    return %c0_i32, %c0_i32_0 : i32, i32
  }
  func.func @transform_7(%arg0: i32) -> (i32, i32) {
    %c0_i32 = arith.constant 0 : i32
    %c0_i32_0 = arith.constant 0 : i32
    return %arg0, %c0_i32 : i32, i32
  }
}

</mosaic_0001>

<llo_original>
// kernel: tpu_custom_call.1
$region0: #{tpu_custom_call.1}
  #allocation0 [shape = 'u32[]', space=smem, size = 0x4, offset = 0x4, fixed_abs, tag = 'smem constant byte address 0x4 - core index']
  #allocation1 [shape = 'u32[144,128]{1,0:T(1,128)}', space=vmem, size = 0x12000, scoped, tag = 'internal scratch']
  %s0 = inlined_call_operand.vmem [shape: f32[512,32], index: 0, kind: input, shape index: {}]
  %s1 = inlined_call_operand.vmem [shape: f32[32,64], index: 1, kind: input, shape index: {}]
  %s2 = inlined_call_operand.vmem [shape: f32[1,64], index: 2, kind: input, shape index: {}]
  %s3 = inlined_call_operand.vmem [shape: f32[64,128], index: 3, kind: input, shape index: {}]
  %s4 = inlined_call_operand.vmem [shape: f32[1,128], index: 4, kind: input, shape index: {}]
  %s5 = inlined_call_operand.vmem [shape: f32[128,128], index: 5, kind: input, shape index: {}]
  %s6 = inlined_call_operand.vmem [shape: f32[1,128], index: 6, kind: input, shape index: {}]
  %s7 = inlined_call_operand.hbm [shape: f32[512,128], index: 7, kind: output, shape index: {}]
  %s8 = sld [smem:[#allocation0]]
  $region61: #{tpu_custom_call.1} parent=0
    _
  %s10 = ssub.s32 1, %s8
  %s11 = scalar_select 0, %s10, %s8
  $region1: #{tpu_custom_call.1} parent=0
    #allocation2 [shape = 'u8[131072]{0}', space=vmem, size = 0x20000, scoped, tag = 'output window, operand 0']
    #allocation3 [shape = 's32[2]{0}', space=sflag, size = 0x8, scoped, tag = 'scoped memory for tpu_custom_call.1']
    %12 = vsyncpa [#allocation3], 0
    %s13 = scalar_lea.sflag [#allocation3], 1
    %14 = vsyncpa %s13, 0
    loop: start=0, step=1, limit=6
    $region2: #{tpu_custom_call.1} parent=1 // loop_pre_header
      _
    $region3: #{tpu_custom_call.1} parent=1 // loop_header
      %s16 = sphi 0, %s20
      %p17 = scmp.ge.s32.totalorder %s16, 6
      %s26 = sphi 0, %s28
      %s29 = sphi 0, %s26
      %s30 = sphi 0, %s29
      %s46 = sphi 0, %s30
      %s50 = sphi 0, %s50
      %s52 = sphi 0, %s50
      %s53 = sphi 0, %s52
      %s67 = sphi 0, %s53
      %s71 = sphi 0, %s71
      %s73 = sphi 0, %s71
      %s74 = sphi 0, %s73
      %s88 = sphi 0, %s74
      %s92 = sphi 0, %s92
      %s94 = sphi 0, %s92
      %s95 = sphi 0, %s94
      %s109 = sphi 0, %s95
      %s113 = sphi 0, %s113
      %s115 = sphi 0, %s113
      %s116 = sphi 0, %s115
      %s130 = sphi 0, %s116
      %s134 = sphi 0, %s134
      %s136 = sphi 0, %s134
      %s137 = sphi 0, %s136
      %s151 = sphi 0, %s137
      %s155 = sphi 0, %s155
      %s157 = sphi 0, %s155
      %s158 = sphi 0, %s157
      %s172 = sphi 0, %s158
      %s178 = sphi 0, %s180
      %s181 = sphi 0, %s178
      %s182 = sphi 0, %s181
      %s198 = sphi 0, %s182
    $region4: #{tpu_custom_call.1} parent=1 // loop_header_branch
      %19 = sbr.rel (%p17) target = $region8
    $region5: #{tpu_custom_call.1} parent=1 // loop_body
      %s21 = ssub.s32 %s16, 1
      %s22 = ssub.s32 %s16, 2
      %s23 = sadd.s32 %s16, 1
      %s24 = ssub.s32 %s16, %s23
      %p25 = scmp.eq.s32.totalorder %s24, 0
      %s27 = sadd.s32 %s26, 1
      %s28 = scalar_select %p25, %s26, %s27
      %p31 = pneg %p25
      %p32 = scmp.eq.s32.totalorder %s16, 3
      %p33 = por %p31, %p32
      %p34 = scmp.ne.s32.totalorder %s26, %s29
      %p35 = scmp.eq.s32.totalorder %s16, 0
      %p36 = por %p34, %p35
      %p37 = scmp.ne.s32.totalorder %s26, %s29
      %p38 = scmp.eq.s32.totalorder %s21, 3
      %p39 = por %p37, %p38
      %p40 = scmp.ne.s32.totalorder %s29, %s30
      %p41 = scmp.eq.s32.totalorder %s21, 0
      %p42 = por %p40, %p41
      %p43 = scmp.ne.s32.totalorder %s29, %s30
      %p44 = scmp.eq.s32.totalorder %s22, 3
      %p45 = por %p43, %p44
      %p47 = scmp.ne.s32.totalorder %s30, %s46
      %p48 = scmp.eq.s32.totalorder %s22, 0
      %p49 = por %p47, %p48
      %s51 = sadd.s32 %s50, 1
      %p54 = scmp.eq.s32.totalorder %s16, 3
      %p55 = scmp.ne.s32.totalorder %s50, %s52
      %p56 = scmp.eq.s32.totalorder %s16, 0
      %p57 = por %p55, %p56
      %p58 = scmp.ne.s32.totalorder %s50, %s52
      %p59 = scmp.eq.s32.totalorder %s21, 3
      %p60 = por %p58, %p59
      %p61 = scmp.ne.s32.totalorder %s52, %s53
      %p62 = scmp.eq.s32.totalorder %s21, 0
      %p63 = por %p61, %p62
      %p64 = scmp.ne.s32.totalorder %s52, %s53
      %p65 = scmp.eq.s32.totalorder %s22, 3
      %p66 = por %p64, %p65
      %p68 = scmp.ne.s32.totalorder %s53, %s67
      %p69 = scmp.eq.s32.totalorder %s22, 0
      %p70 = por %p68, %p69
      %s72 = sadd.s32 %s71, 1
      %p75 = scmp.eq.s32.totalorder %s16, 3
      %p76 = scmp.ne.s32.totalorder %s71, %s73
      %p77 = scmp.eq.s32.totalorder %s16, 0
      %p78 = por %p76, %p77
      %p79 = scmp.ne.s32.totalorder %s71, %s73
      %p80 = scmp.eq.s32.totalorder %s21, 3
      %p81 = por %p79, %p80
      %p82 = scmp.ne.s32.totalorder %s73, %s74
      %p83 = scmp.eq.s32.totalorder %s21, 0
      %p84 = por %p82, %p83
      %p85 = scmp.ne.s32.totalorder %s73, %s74
      %p86 = scmp.eq.s32.totalorder %s22, 3
      %p87 = por %p85, %p86
      %p89 = scmp.ne.s32.totalorder %s74, %s88
      %p90 = scmp.eq.s32.totalorder %s22, 0
      %p91 = por %p89, %p90
      %s93 = sadd.s32 %s92, 1
      %p96 = scmp.eq.s32.totalorder %s16, 3
      %p97 = scmp.ne.s32.totalorder %s92, %s94
      %p98 = scmp.eq.s32.totalorder %s16, 0
      %p99 = por %p97, %p98
      %p100 = scmp.ne.s32.totalorder %s92, %s94
      %p101 = scmp.eq.s32.totalorder %s21, 3
      %p102 = por %p100, %p101
      %p103 = scmp.ne.s32.totalorder %s94, %s95
      %p104 = scmp.eq.s32.totalorder %s21, 0
      %p105 = por %p103, %p104
      %p106 = scmp.ne.s32.totalorder %s94, %s95
      %p107 = scmp.eq.s32.totalorder %s22, 3
      %p108 = por %p106, %p107
      %p110 = scmp.ne.s32.totalorder %s95, %s109
      %p111 = scmp.eq.s32.totalorder %s22, 0
      %p112 = por %p110, %p111
      %s114 = sadd.s32 %s113, 1
      %p117 = scmp.eq.s32.totalorder %s16, 3
      %p118 = scmp.ne.s32.totalorder %s113, %s115
      %p119 = scmp.eq.s32.totalorder %s16, 0
      %p120 = por %p118, %p119
      %p121 = scmp.ne.s32.totalorder %s113, %s115
      %p122 = scmp.eq.s32.totalorder %s21, 3
      %p123 = por %p121, %p122
      %p124 = scmp.ne.s32.totalorder %s115, %s116
      %p125 = scmp.eq.s32.totalorder %s21, 0
      %p126 = por %p124, %p125
      %p127 = scmp.ne.s32.totalorder %s115, %s116
      %p128 = scmp.eq.s32.totalorder %s22, 3
      %p129 = por %p127, %p128
      %p131 = scmp.ne.s32.totalorder %s116, %s130
      %p132 = scmp.eq.s32.totalorder %s22, 0
      %p133 = por %p131, %p132
      %s135 = sadd.s32 %s134, 1
      %p138 = scmp.eq.s32.totalorder %s16, 3
      %p139 = scmp.ne.s32.totalorder %s134, %s136
      %p140 = scmp.eq.s32.totalorder %s16, 0
      %p141 = por %p139, %p140
      %p142 = scmp.ne.s32.totalorder %s134, %s136
      %p143 = scmp.eq.s32.totalorder %s21, 3
      %p144 = por %p142, %p143
      %p145 = scmp.ne.s32.totalorder %s136, %s137
      %p146 = scmp.eq.s32.totalorder %s21, 0
      %p147 = por %p145, %p146
      %p148 = scmp.ne.s32.totalorder %s136, %s137
      %p149 = scmp.eq.s32.totalorder %s22, 3
      %p150 = por %p148, %p149
      %p152 = scmp.ne.s32.totalorder %s137, %s151
      %p153 = scmp.eq.s32.totalorder %s22, 0
      %p154 = por %p152, %p153
      %s156 = sadd.s32 %s155, 1
      %p159 = scmp.eq.s32.totalorder %s16, 3
      %p160 = scmp.ne.s32.totalorder %s155, %s157
      %p161 = scmp.eq.s32.totalorder %s16, 0
      %p162 = por %p160, %p161
      %p163 = scmp.ne.s32.totalorder %s155, %s157
      %p164 = scmp.eq.s32.totalorder %s21, 3
      %p165 = por %p163, %p164
      %p166 = scmp.ne.s32.totalorder %s157, %s158
      %p167 = scmp.eq.s32.totalorder %s21, 0
      %p168 = por %p166, %p167
      %p169 = scmp.ne.s32.totalorder %s157, %s158
      %p170 = scmp.eq.s32.totalorder %s22, 3
      %p171 = por %p169, %p170
      %p173 = scmp.ne.s32.totalorder %s158, %s172
      %p174 = scmp.eq.s32.totalorder %s22, 0
      %p175 = por %p173, %p174
      %s176 = ssub.s32 %s16, %s23
      %p177 = scmp.eq.s32.totalorder %s176, 0
      %s179 = sadd.s32 %s178, 1
      %s180 = scalar_select %p177, %s178, %s179
      %p183 = pneg %p177
      %p184 = scmp.eq.s32.totalorder %s16, 3
      %p185 = por %p183, %p184
      %p186 = scmp.ne.s32.totalorder %s178, %s181
      %p187 = scmp.eq.s32.totalorder %s16, 0
      %p188 = por %p186, %p187
      %p189 = scmp.ne.s32.totalorder %s178, %s181
      %p190 = scmp.eq.s32.totalorder %s21, 3
      %p191 = por %p189, %p190
      %p192 = scmp.ne.s32.totalorder %s181, %s182
      %p193 = scmp.eq.s32.totalorder %s21, 0
      %p194 = por %p192, %p193
      %p195 = scmp.ne.s32.totalorder %s181, %s182
      %p196 = scmp.eq.s32.totalorder %s22, 3
      %p197 = por %p195, %p196
      %p199 = scmp.ne.s32.totalorder %s182, %s198
      %p200 = scmp.eq.s32.totalorder %s22, 0
      %p201 = por %p199, %p200
      %p202 = scmp.le.s32.totalorder 1, %s16
      %p203 = scmp.lt.s32.totalorder %s16, 5
      %p204 = pnand %p202, %p203
      %p205 = pneg %p204
      // Predicated region
      $region9: #{tpu_custom_call.1} parent=5 // pred_check
        _
      $region10: #{tpu_custom_call.1} parent=5 // pred_check_branch
        %207 = sbr.rel (%p204) target = $region12
      $region11: #{tpu_custom_call.1} parent=5 // pred_region
        %s208 = ssub.s32 %s16, 1
        // Predicated region
        $region13: #{tpu_custom_call.1} parent=11 // pred_check
          %p209 = pneg %p63
        $region14: #{tpu_custom_call.1} parent=11 // pred_check_branch
          %211 = sbr.rel (%p209) target = $region16
        $region15: #{tpu_custom_call.1} parent=11 // pred_region
          _
        $region16: #{tpu_custom_call.1} parent=11 // pred_fallthru
          _
        // Predicated region
        $region17: #{tpu_custom_call.1} parent=11 // pred_check
          %p212 = pneg %p84
        $region18: #{tpu_custom_call.1} parent=11 // pred_check_branch
          %214 = sbr.rel (%p212) target = $region20
        $region19: #{tpu_custom_call.1} parent=11 // pred_region
          _
        $region20: #{tpu_custom_call.1} parent=11 // pred_fallthru
          _
        // Predicated region
        $region21: #{tpu_custom_call.1} parent=11 // pred_check
          %p215 = pneg %p105
        $region22: #{tpu_custom_call.1} parent=11 // pred_check_branch
          %217 = sbr.rel (%p215) target = $region24
        $region23: #{tpu_custom_call.1} parent=11 // pred_region
          _
        $region24: #{tpu_custom_call.1} parent=11 // pred_fallthru
          _
        // Predicated region
        $region25: #{tpu_custom_call.1} parent=11 // pred_check
          %p218 = pneg %p126
        $region26: #{tpu_custom_call.1} parent=11 // pred_check_branch
          %220 = sbr.rel (%p218) target = $region28
        $region27: #{tpu_custom_call.1} parent=11 // pred_region
          _
        $region28: #{tpu_custom_call.1} parent=11 // pred_fallthru
          _
        // Predicated region
        $region29: #{tpu_custom_call.1} parent=11 // pred_check
          %p221 = pneg %p147
        $region30: #{tpu_custom_call.1} parent=11 // pred_check_branch
          %223 = sbr.rel (%p221) target = $region32
        $region31: #{tpu_custom_call.1} parent=11 // pred_region
          _
        $region32: #{tpu_custom_call.1} parent=11 // pred_fallthru
          _
        // Predicated region
        $region33: #{tpu_custom_call.1} parent=11 // pred_check
          %p224 = pneg %p168
        $region34: #{tpu_custom_call.1} parent=11 // pred_check_branch
          %226 = sbr.rel (%p224) target = $region36
        $region35: #{tpu_custom_call.1} parent=11 // pred_region
          _
        $region36: #{tpu_custom_call.1} parent=11 // pred_fallthru
          _
      $region12: #{tpu_custom_call.1} parent=5 // pred_fallthru
        _
      %p227 = scmp.lt.s32.totalorder %s16, 4
      // Predicated region
      $region37: #{tpu_custom_call.1} parent=5 // pred_check
        %p228 = pneg %p227
      $region38: #{tpu_custom_call.1} parent=5 // pred_check_branch
        %230 = sbr.rel (%p228) target = $region40
      $region39: #{tpu_custom_call.1} parent=5 // pred_region
        // Predicated region
        $region41: #{tpu_custom_call.1} parent=39 // pred_check
          %p231 = pneg %p36
        $region42: #{tpu_custom_call.1} parent=39 // pred_check_branch
          %233 = sbr.rel (%p231) target = $region44
        $region43: #{tpu_custom_call.1} parent=39 // pred_region
          %s234 = smul.u32 16, %s16
          %p235 = scmp.lt.s32.totalorder %s234, 63
          %s236 = scalar_select %p235, %s234, 63
          %s237 = smul.addr %s236, 8
          %s238 = scalar_lea.vmem %s0, %s237
          %s239 = smul.u32 16, %s16
        $region44: #{tpu_custom_call.1} parent=39 // pred_fallthru
          _
      $region40: #{tpu_custom_call.1} parent=5 // pred_fallthru
        _
      %p240 = scmp.le.s32.totalorder 1, %s16
      %p241 = scmp.lt.s32.totalorder %s16, 5
      %p242 = pnand %p240, %p241
      %p243 = pneg %p242
      // Predicated region
      $region45: #{tpu_custom_call.1} parent=5 // pred_check
        _
      $region46: #{tpu_custom_call.1} parent=5 // pred_check_branch
        %245 = sbr.rel (%p242) target = $region48
      $region47: #{tpu_custom_call.1} parent=5 // pred_region
        %s246 = ssub.s32 %s16, 1
        %s247 = smul.u32 16, %s21
        %p248 = scmp.lt.s32.totalorder %s247, 63
        %s249 = scalar_select %p248, %s247, 63
        %s250 = smul.addr %s249, 8
        %s251 = scalar_lea.vmem %s0, %s250
        %p252 = pneg %p42
        %p253 = pneg %p39
        %p254 = pneg %p63
        %p255 = pneg %p60
        %p256 = pneg %p84
        %p257 = pneg %p81
        %p258 = pneg %p105
        %p259 = pneg %p102
        %p260 = pneg %p126
        %p261 = pneg %p123
        %p262 = pneg %p147
        %p263 = pneg %p144
        %p264 = pneg %p168
        %p265 = pneg %p165
        %p266 = pneg %p194
        %p267 = pneg %p191
        %s268 = sand.u32 %s181, 1
        %s269 = scalar_lea.sflag [#allocation3], %s268
        %s270 = sand.u32 %s181, 1
        %s271 = smul.addr %s270, 128
        %s272 = scalar_lea.vmem [#allocation2], %s271
        %s273 = smul.u32 16, %s21
        %p274 = scmp.lt.s32.totalorder %s273, 63
        %s275 = scalar_select %p274, %s273, 63
        %s276 = smul.addr %s275, 8
        %s277 = scalar_lea.vmem %s0, %s276
        %s278 = smul.u32 16, %s21
        %s279 = smul.u32 16, %s21
        %v280 = vld [vmem:[%s277] sm:$0xff]
        %v281 = vld [vmem:[%s277 + $0x8] sm:$0xff]
        %v282 = vld [vmem:[%s277 + $0x10] sm:$0xff]
        %v283 = vld [vmem:[%s277 + $0x18] sm:$0xff]
        %v284 = vld [vmem:[%s277 + $0x20] sm:$0xff]
        %v285 = vld [vmem:[%s277 + $0x28] sm:$0xff]
        %v286 = vld [vmem:[%s277 + $0x30] sm:$0xff]
        %v287 = vld [vmem:[%s277 + $0x38] sm:$0xff]
        %v288 = vld [vmem:[%s277 + $0x40] sm:$0xff]
        %v289 = vld [vmem:[%s277 + $0x48] sm:$0xff]
        %v290 = vld [vmem:[%s277 + $0x50] sm:$0xff]
        %v291 = vld [vmem:[%s277 + $0x58] sm:$0xff]
        %v292 = vld [vmem:[%s277 + $0x60] sm:$0xff]
        %v293 = vld [vmem:[%s277 + $0x68] sm:$0xff]
        %v294 = vld [vmem:[%s277 + $0x70] sm:$0xff]
        %v295 = vld [vmem:[%s277 + $0x78] sm:$0xff]
        %v296 = vld [vmem:[%s1] sm:$0xff]
        %v297 = vld [vmem:[%s1 + $0x8] sm:$0xff]
        %v298 = vld [vmem:[%s1 + $0x10] sm:$0xff]
        %v299 = vld [vmem:[%s1 + $0x18] sm:$0xff]
        %v300 = vld [vmem:[%s2] sm:$0x1]
        %v302 = vlaneseq
        %v303 = vshrl.u32 %v302, 7
        %v304 = vsub.s32 0, %v303
        %v305 = vrot.slane %v300, %v304
        %vm307 = vcmask 261120
        %v309 = vsel %vm307, %v280, 0
        %v312 = vsel %vm307, %v281, 0
        %v315 = vsel %vm307, %v282, 0
        %v318 = vsel %vm307, %v283, 0
        %v321 = vsel %vm307, %v284, 0
        %v324 = vsel %vm307, %v285, 0
        %v327 = vsel %vm307, %v286, 0
        %v330 = vsel %vm307, %v287, 0
        %v333 = vsel %vm307, %v288, 0
        %v336 = vsel %vm307, %v289, 0
        %v339 = vsel %vm307, %v290, 0
        %v342 = vsel %vm307, %v291, 0
        %v345 = vsel %vm307, %v292, 0
        %v348 = vsel %vm307, %v293, 0
        %v351 = vsel %vm307, %v294, 0
        %v354 = vsel %vm307, %v295, 0
        %356 = vmatprep.subr.mxu0 0.0
        %357 = vmatpush1.msra.mxu0 %v296
        %358 = vmatprep.subr.mxu0 0.0
        %359 = vmatpush1.msra.mxu0 %v297
        %360 = vmatprep.subr.mxu0 0.0
        %361 = vmatpush1.msra.mxu0 %v298
        %362 = vmatprep.subr.mxu0 0.0
        %363 = vmatpush1.msra.mxu0 %v299
        %364 = vmatprep.subr.mxu0 0.0
        %365 = vmatpush1.msra.mxu0 0.0
        %366 = vmatprep.subr.mxu0 0.0
        %367 = vmatpush1.msra.mxu0 0.0
        %368 = vmatprep.subr.mxu0 0.0
        %369 = vmatpush1.msra.mxu0 0.0
        %370 = vmatprep.subr.mxu0 0.0
        %371 = vmatpush1.msra.mxu0 0.0
        %372 = vmatprep.subr.mxu0 0.0
        %373 = vmatpush1.msra.mxu0 0.0
        %374 = vmatprep.subr.mxu0 0.0
        %375 = vmatpush1.msra.mxu0 0.0
        %376 = vmatprep.subr.mxu0 0.0
        %377 = vmatpush1.msra.mxu0 0.0
        %378 = vmatprep.subr.mxu0 0.0
        %379 = vmatpush1.msra.mxu0 0.0
        %380 = vmatprep.subr.mxu0 0.0
        %381 = vmatpush1.msra.mxu0 0.0
        %382 = vmatprep.subr.mxu0 0.0
        %383 = vmatpush1.msra.mxu0 0.0
        %384 = vmatprep.subr.mxu0 0.0
        %385 = vmatpush1.msra.mxu0 0.0
        %386 = vmatprep.subr.mxu0 0.0
        %387 = vmatpush1.msra.mxu0 0.0
        %388 = vmatprep.subr.mxu0 0.0
        %389 = vmatpush1.msra.mxu0 0.0
        %390 = vmatprep.subr.mxu0 0.0
        %391 = vmatpush1.msra.mxu0 0.0
        %392 = vmatprep.subr.mxu0 0.0
        %393 = vmatpush1.msra.mxu0 0.0
        %394 = vmatprep.subr.mxu0 0.0
        %395 = vmatpush1.msra.mxu0 0.0
        %396 = vmatprep.subr.mxu0 0.0
        %397 = vmatpush1.msra.mxu0 0.0
        %398 = vmatprep.subr.mxu0 0.0
        %399 = vmatpush1.msra.mxu0 0.0
        %400 = vmatprep.subr.mxu0 0.0
        %401 = vmatpush1.msra.mxu0 0.0
        %402 = vmatprep.subr.mxu0 0.0
        %403 = vmatpush1.msra.mxu0 0.0
        %404 = vmatprep.subr.mxu0 0.0
        %405 = vmatpush1.msra.mxu0 0.0
        %406 = vmatprep.subr.mxu0 0.0
        %407 = vmatpush1.msra.mxu0 0.0
        %408 = vmatprep.subr.mxu0 0.0
        %409 = vmatpush1.msra.mxu0 0.0
        %410 = vmatprep.subr.mxu0 0.0
        %411 = vmatpush1.msra.mxu0 0.0
        %412 = vmatprep.subr.mxu0 0.0
        %413 = vmatpush1.msra.mxu0 0.0
        %414 = vmatprep.subr.mxu0 0.0
        %415 = vmatpush1.msra.mxu0 0.0
        %416 = vmatprep.subr.mxu0 0.0
        %417 = vmatpush1.msra.mxu0 0.0
        %418 = vmatprep.subr.mxu0 0.0
        %419 = vmatpush1.msra.mxu0 0.0
        %420 = vmatprep.mubr.f32.mxu0 0.0
        %421 = vmatmul.mubr.f32.gmra.mrb[0].mxu0 %v309
        %v422 = vpop.f32.mrb[0].mxu0
        %v423 = vadd.f32 %v305, %v422
        %v424 = vpop.f32.mrb[0].mxu0
        %425 = vmatprep.mubr.f32.mxu0 0.0
        %426 = vmatmul.mubr.f32.gmra.mrb[0].mxu0 %v312
        %v427 = vpop.f32.mrb[0].mxu0
        %v428 = vadd.f32 %v305, %v427
        %v429 = vpop.f32.mrb[0].mxu0
        %430 = vmatprep.mubr.f32.mxu0 0.0
        %431 = vmatmul.mubr.f32.gmra.mrb[0].mxu0 %v315
        %v432 = vpop.f32.mrb[0].mxu0
        %v433 = vadd.f32 %v305, %v432
        %v434 = vpop.f32.mrb[0].mxu0
        %435 = vmatprep.mubr.f32.mxu0 0.0
        %436 = vmatmul.mubr.f32.gmra.mrb[0].mxu0 %v318
        %v437 = vpop.f32.mrb[0].mxu0
        %v438 = vadd.f32 %v305, %v437
        %v439 = vpop.f32.mrb[0].mxu0
        %440 = vmatprep.mubr.f32.mxu0 0.0
        %441 = vmatmul.mubr.f32.gmra.mrb[0].mxu0 %v321
        %v442 = vpop.f32.mrb[0].mxu0
        %v443 = vadd.f32 %v305, %v442
        %v444 = vpop.f32.mrb[0].mxu0
        %445 = vmatprep.mubr.f32.mxu0 0.0
        %446 = vmatmul.mubr.f32.gmra.mrb[0].mxu0 %v324
        %v447 = vpop.f32.mrb[0].mxu0
        %v448 = vadd.f32 %v305, %v447
        %v449 = vpop.f32.mrb[0].mxu0
        %450 = vmatprep.mubr.f32.mxu0 0.0
        %451 = vmatmul.mubr.f32.gmra.mrb[0].mxu0 %v327
        %v452 = vpop.f32.mrb[0].mxu0
        %v453 = vadd.f32 %v305, %v452
        %v454 = vpop.f32.mrb[0].mxu0
        %455 = vmatprep.mubr.f32.mxu0 0.0
        %456 = vmatmul.mubr.f32.gmra.mrb[0].mxu0 %v330
        %v457 = vpop.f32.mrb[0].mxu0
        %v458 = vadd.f32 %v305, %v457
        %v459 = vpop.f32.mrb[0].mxu0
        %460 = vmatprep.mubr.f32.mxu0 0.0
        %461 = vmatmul.mubr.f32.gmra.mrb[0].mxu0 %v333
        %v462 = vpop.f32.mrb[0].mxu0
        %v463 = vadd.f32 %v305, %v462
        %v464 = vpop.f32.mrb[0].mxu0
        %465 = vmatprep.mubr.f32.mxu0 0.0
        %466 = vmatmul.mubr.f32.gmra.mrb[0].mxu0 %v336
        %v467 = vpop.f32.mrb[0].mxu0
        %v468 = vadd.f32 %v305, %v467
        %v469 = vpop.f32.mrb[0].mxu0
        %470 = vmatprep.mubr.f32.mxu0 0.0
        %471 = vmatmul.mubr.f32.gmra.mrb[0].mxu0 %v339
        %v472 = vpop.f32.mrb[0].mxu0
        %v473 = vadd.f32 %v305, %v472
        %v474 = vpop.f32.mrb[0].mxu0
        %475 = vmatprep.mubr.f32.mxu0 0.0
        %476 = vmatmul.mubr.f32.gmra.mrb[0].mxu0 %v342
        %v477 = vpop.f32.mrb[0].mxu0
        %v478 = vadd.f32 %v305, %v477
        %v479 = vpop.f32.mrb[0].mxu0
        %480 = vmatprep.mubr.f32.mxu0 0.0
        %481 = vmatmul.mubr.f32.gmra.mrb[0].mxu0 %v345
        %v482 = vpop.f32.mrb[0].mxu0
        %v483 = vadd.f32 %v305, %v482
        %v484 = vpop.f32.mrb[0].mxu0
        %485 = vmatprep.mubr.f32.mxu0 0.0
        %486 = vmatmul.mubr.f32.gmra.mrb[0].mxu0 %v348
        %v487 = vpop.f32.mrb[0].mxu0
        %v488 = vadd.f32 %v305, %v487
        %v489 = vpop.f32.mrb[0].mxu0
        %490 = vmatprep.mubr.f32.mxu0 0.0
        %491 = vmatmul.mubr.f32.gmra.mrb[0].mxu0 %v351
        %v492 = vpop.f32.mrb[0].mxu0
        %v493 = vadd.f32 %v305, %v492
        %v494 = vpop.f32.mrb[0].mxu0
        %495 = vmatprep.mubr.f32.mxu0 0.0
        %496 = vmatmul.mubr.f32.gmra.mrb[0].mxu0 %v354
        %v497 = vpop.f32.mrb[0].mxu0
        %v498 = vadd.f32 %v305, %v497
        %v499 = vpop.f32.mrb[0].mxu0
        %500 = vdwg.mxu0
        %v501 = vmax.f32 %v423, 0.0
        %v502 = vmax.f32 %v428, 0.0
        %v503 = vmax.f32 %v433, 0.0
        %v504 = vmax.f32 %v438, 0.0
        %v505 = vmax.f32 %v443, 0.0
        %v506 = vmax.f32 %v448, 0.0
        %v507 = vmax.f32 %v453, 0.0
        %v508 = vmax.f32 %v458, 0.0
        %v509 = vmax.f32 %v463, 0.0
        %v510 = vmax.f32 %v468, 0.0
        %v511 = vmax.f32 %v473, 0.0
        %v512 = vmax.f32 %v478, 0.0
        %v513 = vmax.f32 %v483, 0.0
        %v514 = vmax.f32 %v488, 0.0
        %v515 = vmax.f32 %v493, 0.0
        %v516 = vmax.f32 %v498, 0.0
        %v517 = vld [vmem:[%s3] sm:$0xff]
        %v518 = vld [vmem:[%s3 + $0x8] sm:$0xff]
        %v519 = vld [vmem:[%s3 + $0x10] sm:$0xff]
        %v520 = vld [vmem:[%s3 + $0x18] sm:$0xff]
        %v521 = vld [vmem:[%s3 + $0x20] sm:$0xff]
        %v522 = vld [vmem:[%s3 + $0x28] sm:$0xff]
        %v523 = vld [vmem:[%s3 + $0x30] sm:$0xff]
        %v524 = vld [vmem:[%s3 + $0x38] sm:$0xff]
        %v525 = vld [vmem:[%s4] sm:$0x1]
        %v527 = vlaneseq
        %v528 = vshrl.u32 %v527, 7
        %v529 = vsub.s32 0, %v528
        %v530 = vrot.slane %v525, %v529
        %vm532 = vcmask 523264
        %v534 = vsel %vm532, %v501, 0
        %v537 = vsel %vm532, %v502, 0
        %v540 = vsel %vm532, %v503, 0
        %v543 = vsel %vm532, %v504, 0
        %v546 = vsel %vm532, %v505, 0
        %v549 = vsel %vm532, %v506, 0
        %v552 = vsel %vm532, %v507, 0
        %v555 = vsel %vm532, %v508, 0
        %v558 = vsel %vm532, %v509, 0
        %v561 = vsel %vm532, %v510, 0
        %v564 = vsel %vm532, %v511, 0
        %v567 = vsel %vm532, %v512, 0
        %v570 = vsel %vm532, %v513, 0
        %v573 = vsel %vm532, %v514, 0
        %v576 = vsel %vm532, %v515, 0
        %v579 = vsel %vm532, %v516, 0
        %581 = vmatprep.subr.mxu0 0.0
        %582 = vmatpush1.msra.mxu0 %v517
        %583 = vmatprep.subr.mxu0 0.0
        %584 = vmatpush1.msra.mxu0 %v518
        %585 = vmatprep.subr.mxu0 0.0
        %586 = vmatpush1.msra.mxu0 %v519
        %587 = vmatprep.subr.mxu0 0.0
        %588 = vmatpush1.msra.mxu0 %v520
        %589 = vmatprep.subr.mxu0 0.0
        %590 = vmatpush1.msra.mxu0 %v521
        %591 = vmatprep.subr.mxu0 0.0
        %592 = vmatpush1.msra.mxu0 %v522
        %593 = vmatprep.subr.mxu0 0.0
        %594 = vmatpush1.msra.mxu0 %v523
        %595 = vmatprep.subr.mxu0 0.0
        %596 = vmatpush1.msra.mxu0 %v524
        %597 = vmatprep.subr.mxu0 0.0
        %598 = vmatpush1.msra.mxu0 0.0
        %599 = vmatprep.subr.mxu0 0.0
        %600 = vmatpush1.msra.mxu0 0.0
        %601 = vmatprep.subr.mxu0 0.0
        %602 = vmatpush1.msra.mxu0 0.0
        %603 = vmatprep.subr.mxu0 0.0
        %604 = vmatpush1.msra.mxu0 0.0
        %605 = vmatprep.subr.mxu0 0.0
        %606 = vmatpush1.msra.mxu0 0.0
        %607 = vmatprep.subr.mxu0 0.0
        %608 = vmatpush1.msra.mxu0 0.0
        %609 = vmatprep.subr.mxu0 0.0
        %610 = vmatpush1.msra.mxu0 0.0
        %611 = vmatprep.subr.mxu0 0.0
        %612 = vmatpush1.msra.mxu0 0.0
        %613 = vmatprep.subr.mxu0 0.0
        %614 = vmatpush1.msra.mxu0 0.0
        %615 = vmatprep.subr.mxu0 0.0
        %616 = vmatpush1.msra.mxu0 0.0
        %617 = vmatprep.subr.mxu0 0.0
        %618 = vmatpush1.msra.mxu0 0.0
        %619 = vmatprep.subr.mxu0 0.0
        %620 = vmatpush1.msra.mxu0 0.0
        %621 = vmatprep.subr.mxu0 0.0
        %622 = vmatpush1.msra.mxu0 0.0
        %623 = vmatprep.subr.mxu0 0.0
        %624 = vmatpush1.msra.mxu0 0.0
        %625 = vmatprep.subr.mxu0 0.0
        %626 = vmatpush1.msra.mxu0 0.0
        %627 = vmatprep.subr.mxu0 0.0
        %628 = vmatpush1.msra.mxu0 0.0
        %629 = vmatprep.subr.mxu0 0.0
        %630 = vmatpush1.msra.mxu0 0.0
        %631 = vmatprep.subr.mxu0 0.0
        %632 = vmatpush1.msra.mxu0 0.0
        %633 = vmatprep.subr.mxu0 0.0
        %634 = vmatpush1.msra.mxu0 0.0
        %635 = vmatprep.subr.mxu0 0.0
        %636 = vmatpush1.msra.mxu0 0.0
        %637 = vmatprep.subr.mxu0 0.0
        %638 = vmatpush1.msra.mxu0 0.0
        %639 = vmatprep.subr.mxu0 0.0
        %640 = vmatpush1.msra.mxu0 0.0
        %641 = vmatprep.subr.mxu0 0.0
        %642 = vmatpush1.msra.mxu0 0.0
        %643 = vmatprep.subr.mxu0 0.0
        %644 = vmatpush1.msra.mxu0 0.0
        %645 = vmatprep.mubr.f32.mxu0 0.0
        %646 = vmatmul.mubr.f32.gmra.mrb[0].mxu0 %v534
        %v647 = vpop.f32.mrb[0].mxu0
        %v648 = vadd.f32 %v530, %v647
        %v649 = vpop.f32.mrb[0].mxu0
        %650 = vmatprep.mubr.f32.mxu0 0.0
        %651 = vmatmul.mubr.f32.gmra.mrb[0].mxu0 %v537
        %v652 = vpop.f32.mrb[0].mxu0
        %v653 = vadd.f32 %v530, %v652
        %v654 = vpop.f32.mrb[0].mxu0
        %655 = vmatprep.mubr.f32.mxu0 0.0
        %656 = vmatmul.mubr.f32.gmra.mrb[0].mxu0 %v540
        %v657 = vpop.f32.mrb[0].mxu0
        %v658 = vadd.f32 %v530, %v657
        %v659 = vpop.f32.mrb[0].mxu0
        %660 = vmatprep.mubr.f32.mxu0 0.0
        %661 = vmatmul.mubr.f32.gmra.mrb[0].mxu0 %v543
        %v662 = vpop.f32.mrb[0].mxu0
        %v663 = vadd.f32 %v530, %v662
        %v664 = vpop.f32.mrb[0].mxu0
        %665 = vmatprep.mubr.f32.mxu0 0.0
        %666 = vmatmul.mubr.f32.gmra.mrb[0].mxu0 %v546
        %v667 = vpop.f32.mrb[0].mxu0
        %v668 = vadd.f32 %v530, %v667
        %v669 = vpop.f32.mrb[0].mxu0
        %670 = vmatprep.mubr.f32.mxu0 0.0
        %671 = vmatmul.mubr.f32.gmra.mrb[0].mxu0 %v549
        %v672 = vpop.f32.mrb[0].mxu0
        %v673 = vadd.f32 %v530, %v672
        %v674 = vpop.f32.mrb[0].mxu0
        %675 = vmatprep.mubr.f32.mxu0 0.0
        %676 = vmatmul.mubr.f32.gmra.mrb[0].mxu0 %v552
        %v677 = vpop.f32.mrb[0].mxu0
        %v678 = vadd.f32 %v530, %v677
        %v679 = vpop.f32.mrb[0].mxu0
        %680 = vmatprep.mubr.f32.mxu0 0.0
        %681 = vmatmul.mubr.f32.gmra.mrb[0].mxu0 %v555
        %v682 = vpop.f32.mrb[0].mxu0
        %v683 = vadd.f32 %v530, %v682
        %v684 = vpop.f32.mrb[0].mxu0
        %685 = vmatprep.mubr.f32.mxu0 0.0
        %686 = vmatmul.mubr.f32.gmra.mrb[0].mxu0 %v558
        %v687 = vpop.f32.mrb[0].mxu0
        %v688 = vadd.f32 %v530, %v687
        %v689 = vpop.f32.mrb[0].mxu0
        %690 = vmatprep.mubr.f32.mxu0 0.0
        %691 = vmatmul.mubr.f32.gmra.mrb[0].mxu0 %v561
        %v692 = vpop.f32.mrb[0].mxu0
        %v693 = vadd.f32 %v530, %v692
        %v694 = vpop.f32.mrb[0].mxu0
        %695 = vmatprep.mubr.f32.mxu0 0.0
        %696 = vmatmul.mubr.f32.gmra.mrb[0].mxu0 %v564
        %v697 = vpop.f32.mrb[0].mxu0
        %v698 = vadd.f32 %v530, %v697
        %v699 = vpop.f32.mrb[0].mxu0
        %700 = vmatprep.mubr.f32.mxu0 0.0
        %701 = vmatmul.mubr.f32.gmra.mrb[0].mxu0 %v567
        %v702 = vpop.f32.mrb[0].mxu0
        %v703 = vadd.f32 %v530, %v702
        %v704 = vpop.f32.mrb[0].mxu0
        %705 = vmatprep.mubr.f32.mxu0 0.0
        %706 = vmatmul.mubr.f32.gmra.mrb[0].mxu0 %v570
        %v707 = vpop.f32.mrb[0].mxu0
        %v708 = vadd.f32 %v530, %v707
        %v709 = vpop.f32.mrb[0].mxu0
        %710 = vmatprep.mubr.f32.mxu0 0.0
        %711 = vmatmul.mubr.f32.gmra.mrb[0].mxu0 %v573
        %v712 = vpop.f32.mrb[0].mxu0
        %v713 = vadd.f32 %v530, %v712
        %v714 = vpop.f32.mrb[0].mxu0
        %715 = vmatprep.mubr.f32.mxu0 0.0
        %716 = vmatmul.mubr.f32.gmra.mrb[0].mxu0 %v576
        %v717 = vpop.f32.mrb[0].mxu0
        %v718 = vadd.f32 %v530, %v717
        %v719 = vpop.f32.mrb[0].mxu0
        %720 = vmatprep.mubr.f32.mxu0 0.0
        %721 = vmatmul.mubr.f32.gmra.mrb[0].mxu0 %v579
        %v722 = vpop.f32.mrb[0].mxu0
        %v723 = vadd.f32 %v530, %v722
        %v724 = vpop.f32.mrb[0].mxu0
        %725 = vdwg.mxu0
        %v726 = vmax.f32 %v648, 0.0
        %v727 = vmax.f32 %v653, 0.0
        %v728 = vmax.f32 %v658, 0.0
        %v729 = vmax.f32 %v663, 0.0
        %v730 = vmax.f32 %v668, 0.0
        %v731 = vmax.f32 %v673, 0.0
        %v732 = vmax.f32 %v678, 0.0
        %v733 = vmax.f32 %v683, 0.0
        %v734 = vmax.f32 %v688, 0.0
        %v735 = vmax.f32 %v693, 0.0
        %v736 = vmax.f32 %v698, 0.0
        %v737 = vmax.f32 %v703, 0.0
        %v738 = vmax.f32 %v708, 0.0
        %v739 = vmax.f32 %v713, 0.0
        %v740 = vmax.f32 %v718, 0.0
        %v741 = vmax.f32 %v723, 0.0
        %v742 = vld [vmem:[%s5] sm:$0xff]
        %v743 = vld [vmem:[%s5 + $0x8] sm:$0xff]
        %v744 = vld [vmem:[%s5 + $0x10] sm:$0xff]
        %v745 = vld [vmem:[%s5 + $0x18] sm:$0xff]
        %v746 = vld [vmem:[%s5 + $0x20] sm:$0xff]
        %v747 = vld [vmem:[%s5 + $0x28] sm:$0xff]
        %v748 = vld [vmem:[%s5 + $0x30] sm:$0xff]
        %v749 = vld [vmem:[%s5 + $0x38] sm:$0xff]
        %v750 = vld [vmem:[%s5 + $0x40] sm:$0xff]
        %v751 = vld [vmem:[%s5 + $0x48] sm:$0xff]
        %v752 = vld [vmem:[%s5 + $0x50] sm:$0xff]
        %v753 = vld [vmem:[%s5 + $0x58] sm:$0xff]
        %v754 = vld [vmem:[%s5 + $0x60] sm:$0xff]
        %v755 = vld [vmem:[%s5 + $0x68] sm:$0xff]
        %v756 = vld [vmem:[%s5 + $0x70] sm:$0xff]
        %v757 = vld [vmem:[%s5 + $0x78] sm:$0xff]
        %v758 = vld [vmem:[%s6] sm:$0x1]
        %v760 = vlaneseq
        %v761 = vshrl.u32 %v760, 7
        %v762 = vsub.s32 0, %v761
        %v763 = vrot.slane %v758, %v762
        %765 = vmatprep.subr.mxu0 0.0
        %766 = vmatpush1.msra.mxu0 %v742
        %767 = vmatprep.subr.mxu0 0.0
        %768 = vmatpush1.msra.mxu0 %v743
        %769 = vmatprep.subr.mxu0 0.0
        %770 = vmatpush1.msra.mxu0 %v744
        %771 = vmatprep.subr.mxu0 0.0
        %772 = vmatpush1.msra.mxu0 %v745
        %773 = vmatprep.subr.mxu0 0.0
        %774 = vmatpush1.msra.mxu0 %v746
        %775 = vmatprep.subr.mxu0 0.0
        %776 = vmatpush1.msra.mxu0 %v747
        %777 = vmatprep.subr.mxu0 0.0
        %778 = vmatpush1.msra.mxu0 %v748
        %779 = vmatprep.subr.mxu0 0.0
        %780 = vmatpush1.msra.mxu0 %v749
        %781 = vmatprep.subr.mxu0 0.0
        %782 = vmatpush1.msra.mxu0 %v750
        %783 = vmatprep.subr.mxu0 0.0
        %784 = vmatpush1.msra.mxu0 %v751
        %785 = vmatprep.subr.mxu0 0.0
        %786 = vmatpush1.msra.mxu0 %v752
        %787 = vmatprep.subr.mxu0 0.0
        %788 = vmatpush1.msra.mxu0 %v753
        %789 = vmatprep.subr.mxu0 0.0
        %790 = vmatpush1.msra.mxu0 %v754
        %791 = vmatprep.subr.mxu0 0.0
        %792 = vmatpush1.msra.mxu0 %v755
        %793 = vmatprep.subr.mxu0 0.0
        %794 = vmatpush1.msra.mxu0 %v756
        %795 = vmatprep.subr.mxu0 0.0
        %796 = vmatpush1.msra.mxu0 %v757
        %797 = vmatprep.subr.mxu0 0.0
        %798 = vmatpush1.msra.mxu0 0.0
        %799 = vmatprep.subr.mxu0 0.0
        %800 = vmatpush1.msra.mxu0 0.0
        %801 = vmatprep.subr.mxu0 0.0
        %802 = vmatpush1.msra.mxu0 0.0
        %803 = vmatprep.subr.mxu0 0.0
        %804 = vmatpush1.msra.mxu0 0.0
        %805 = vmatprep.subr.mxu0 0.0
        %806 = vmatpush1.msra.mxu0 0.0
        %807 = vmatprep.subr.mxu0 0.0
        %808 = vmatpush1.msra.mxu0 0.0
        %809 = vmatprep.subr.mxu0 0.0
        %810 = vmatpush1.msra.mxu0 0.0
        %811 = vmatprep.subr.mxu0 0.0
        %812 = vmatpush1.msra.mxu0 0.0
        %813 = vmatprep.subr.mxu0 0.0
        %814 = vmatpush1.msra.mxu0 0.0
        %815 = vmatprep.subr.mxu0 0.0
        %816 = vmatpush1.msra.mxu0 0.0
        %817 = vmatprep.subr.mxu0 0.0
        %818 = vmatpush1.msra.mxu0 0.0
        %819 = vmatprep.subr.mxu0 0.0
        %820 = vmatpush1.msra.mxu0 0.0
        %821 = vmatprep.subr.mxu0 0.0
        %822 = vmatpush1.msra.mxu0 0.0
        %823 = vmatprep.subr.mxu0 0.0
        %824 = vmatpush1.msra.mxu0 0.0
        %825 = vmatprep.subr.mxu0 0.0
        %826 = vmatpush1.msra.mxu0 0.0
        %827 = vmatprep.subr.mxu0 0.0
        %828 = vmatpush1.msra.mxu0 0.0
        %829 = vmatprep.mubr.f32.mxu0 0.0
        %830 = vmatmul.mubr.f32.gmra.mrb[0].mxu0 %v726
        %v831 = vpop.f32.mrb[0].mxu0
        %v832 = vadd.f32 %v763, %v831
        %v833 = vpop.f32.mrb[0].mxu0
        %834 = vmatprep.mubr.f32.mxu0 0.0
        %835 = vmatmul.mubr.f32.gmra.mrb[0].mxu0 %v727
        %v836 = vpop.f32.mrb[0].mxu0
        %v837 = vadd.f32 %v763, %v836
        %v838 = vpop.f32.mrb[0].mxu0
        %839 = vmatprep.mubr.f32.mxu0 0.0
        %840 = vmatmul.mubr.f32.gmra.mrb[0].mxu0 %v728
        %v841 = vpop.f32.mrb[0].mxu0
        %v842 = vadd.f32 %v763, %v841
        %v843 = vpop.f32.mrb[0].mxu0
        %844 = vmatprep.mubr.f32.mxu0 0.0
        %845 = vmatmul.mubr.f32.gmra.mrb[0].mxu0 %v729
        %v846 = vpop.f32.mrb[0].mxu0
        %v847 = vadd.f32 %v763, %v846
        %v848 = vpop.f32.mrb[0].mxu0
        %849 = vmatprep.mubr.f32.mxu0 0.0
        %850 = vmatmul.mubr.f32.gmra.mrb[0].mxu0 %v730
        %v851 = vpop.f32.mrb[0].mxu0
        %v852 = vadd.f32 %v763, %v851
        %v853 = vpop.f32.mrb[0].mxu0
        %854 = vmatprep.mubr.f32.mxu0 0.0
        %855 = vmatmul.mubr.f32.gmra.mrb[0].mxu0 %v731
        %v856 = vpop.f32.mrb[0].mxu0
        %v857 = vadd.f32 %v763, %v856
        %v858 = vpop.f32.mrb[0].mxu0
        %859 = vmatprep.mubr.f32.mxu0 0.0
        %860 = vmatmul.mubr.f32.gmra.mrb[0].mxu0 %v732
        %v861 = vpop.f32.mrb[0].mxu0
        %v862 = vadd.f32 %v763, %v861
        %v863 = vpop.f32.mrb[0].mxu0
        %864 = vmatprep.mubr.f32.mxu0 0.0
        %865 = vmatmul.mubr.f32.gmra.mrb[0].mxu0 %v733
        %v866 = vpop.f32.mrb[0].mxu0
        %v867 = vadd.f32 %v763, %v866
        %v868 = vpop.f32.mrb[0].mxu0
        %869 = vmatprep.mubr.f32.mxu0 0.0
        %870 = vmatmul.mubr.f32.gmra.mrb[0].mxu0 %v734
        %v871 = vpop.f32.mrb[0].mxu0
        %v872 = vadd.f32 %v763, %v871
        %v873 = vpop.f32.mrb[0].mxu0
        %874 = vmatprep.mubr.f32.mxu0 0.0
        %875 = vmatmul.mubr.f32.gmra.mrb[0].mxu0 %v735
        %v876 = vpop.f32.mrb[0].mxu0
        %v877 = vadd.f32 %v763, %v876
        %v878 = vpop.f32.mrb[0].mxu0
        %879 = vmatprep.mubr.f32.mxu0 0.0
        %880 = vmatmul.mubr.f32.gmra.mrb[0].mxu0 %v736
        %v881 = vpop.f32.mrb[0].mxu0
        %v882 = vadd.f32 %v763, %v881
        %v883 = vpop.f32.mrb[0].mxu0
        %884 = vmatprep.mubr.f32.mxu0 0.0
        %885 = vmatmul.mubr.f32.gmra.mrb[0].mxu0 %v737
        %v886 = vpop.f32.mrb[0].mxu0
        %v887 = vadd.f32 %v763, %v886
        %v888 = vpop.f32.mrb[0].mxu0
        %889 = vmatprep.mubr.f32.mxu0 0.0
        %890 = vmatmul.mubr.f32.gmra.mrb[0].mxu0 %v738
        %v891 = vpop.f32.mrb[0].mxu0
        %v892 = vadd.f32 %v763, %v891
        %v893 = vpop.f32.mrb[0].mxu0
        %894 = vmatprep.mubr.f32.mxu0 0.0
        %895 = vmatmul.mubr.f32.gmra.mrb[0].mxu0 %v739
        %v896 = vpop.f32.mrb[0].mxu0
        %v897 = vadd.f32 %v763, %v896
        %v898 = vpop.f32.mrb[0].mxu0
        %899 = vmatprep.mubr.f32.mxu0 0.0
        %900 = vmatmul.mubr.f32.gmra.mrb[0].mxu0 %v740
        %v901 = vpop.f32.mrb[0].mxu0
        %v902 = vadd.f32 %v763, %v901
        %v903 = vpop.f32.mrb[0].mxu0
        %904 = vmatprep.mubr.f32.mxu0 0.0
        %905 = vmatmul.mubr.f32.gmra.mrb[0].mxu0 %v741
        %v906 = vpop.f32.mrb[0].mxu0
        %v907 = vadd.f32 %v763, %v906
        %v908 = vpop.f32.mrb[0].mxu0
        %909 = vdwg.mxu0
        %910 = vst [vmem:[%s272] sm:$0xff] %v832
        %911 = vst [vmem:[%s272 + $0x8] sm:$0xff] %v837
        %912 = vst [vmem:[%s272 + $0x10] sm:$0xff] %v842
        %913 = vst [vmem:[%s272 + $0x18] sm:$0xff] %v847
        %914 = vst [vmem:[%s272 + $0x20] sm:$0xff] %v852
        %915 = vst [vmem:[%s272 + $0x28] sm:$0xff] %v857
        %916 = vst [vmem:[%s272 + $0x30] sm:$0xff] %v862
        %917 = vst [vmem:[%s272 + $0x38] sm:$0xff] %v867
        %918 = vst [vmem:[%s272 + $0x40] sm:$0xff] %v872
        %919 = vst [vmem:[%s272 + $0x48] sm:$0xff] %v877
        %920 = vst [vmem:[%s272 + $0x50] sm:$0xff] %v882
        %921 = vst [vmem:[%s272 + $0x58] sm:$0xff] %v887
        %922 = vst [vmem:[%s272 + $0x60] sm:$0xff] %v892
        %923 = vst [vmem:[%s272 + $0x68] sm:$0xff] %v897
        %924 = vst [vmem:[%s272 + $0x70] sm:$0xff] %v902
        %925 = vst [vmem:[%s272 + $0x78] sm:$0xff] %v907
        %s926 = sand.u32 %s181, 1
        %s927 = scalar_lea.sflag [#allocation3], %s926
        %s928 = sand.u32 %s181, 1
        %s929 = smul.addr %s928, 128
        %s930 = scalar_lea.vmem [#allocation2], %s929
        // Predicated region
        $region49: #{tpu_custom_call.1} parent=47 // pred_check
          %p931 = pneg %p191
        $region50: #{tpu_custom_call.1} parent=47 // pred_check_branch
          %933 = sbr.rel (%p931) target = $region52
        $region51: #{tpu_custom_call.1} parent=47 // pred_region
          %s934 = smul.u32 16, %s21
          %s936 = ssub.s32 2048, 2048
          %937 = vsyncadd %s927, %s936
          %s938 = smul.addr %s934, 128
          %s939 = scalar_lea.hbm %s7, %s938
          %s940 = sshll.u32 %s930, 4
          %s941 = int_to_ptr.vmem [resolvable:$true] %s940
          %946 = dma.vmem_to_hbm [thread:$0]  %s941, 2048, %s939, %s927, 128, 128, 8
        $region52: #{tpu_custom_call.1} parent=47 // pred_fallthru
          _
      $region48: #{tpu_custom_call.1} parent=5 // pred_fallthru
        _
      %p947 = scmp.le.s32.totalorder 2, %s16
      // Predicated region
      $region53: #{tpu_custom_call.1} parent=5 // pred_check
        %p948 = pneg %p947
      $region54: #{tpu_custom_call.1} parent=5 // pred_check_branch
        %950 = sbr.rel (%p948) target = $region56
      $region55: #{tpu_custom_call.1} parent=5 // pred_region
        %s951 = ssub.s32 %s16, 2
        // Predicated region
        $region57: #{tpu_custom_call.1} parent=55 // pred_check
          %p952 = pneg %p197
        $region58: #{tpu_custom_call.1} parent=55 // pred_check_branch
          %954 = sbr.rel (%p952) target = $region60
        $region59: #{tpu_custom_call.1} parent=55 // pred_region
          %s955 = sand.u32 %s182, 1
          %s956 = scalar_lea.sflag [#allocation3], %s955
          %s957 = sand.u32 %s182, 1
          %s958 = smul.addr %s957, 128
          %s959 = scalar_lea.vmem [#allocation2], %s958
          %960 = dma.done %s956, 2048
        $region60: #{tpu_custom_call.1} parent=55 // pred_fallthru
          _
      $region56: #{tpu_custom_call.1} parent=5 // pred_fallthru
        _
    $region6: #{tpu_custom_call.1} parent=1 // loop_footer
      %s20 = sadd.s32 1, %s16
    $region7: #{tpu_custom_call.1} parent=1 // loop_footer_branch
      %15 = sbr.rel target = $region3
    $region8: #{tpu_custom_call.1} parent=1 // loop_exit
      _
    %961 = vsyncpa [#allocation3], 1
    %s962 = scalar_lea.sflag [#allocation3], 1
    %963 = vsyncpa %s962, 1

</llo_original>
